<compile_context>
chip_gen: v7x
topology: tpu7x:2x2x1
jax: 0.10.0
libtpu: 0.0.40
codegen_flags: <defaults>
</compile_context>

<pallas_src>
import jax
import jax.numpy as jnp
from jax.experimental import pallas as pl
from jax.experimental.pallas import tpu as pltpu


def _round_up(x, m):
    return ((x + m - 1) // m) * m


def _largest_tile(total, cap):
    """Largest multiple of 128 that divides `total` (itself a multiple of 128)
    and is <= cap (floored at 128)."""
    cap = max(128, min(cap, total))
    t = (cap // 128) * 128
    while total % t != 0:
        t -= 128
    return t


def _default_vmem_limit():
    """~75% of physical VMEM, capped at 96 MiB (v5e/v6e: 128 MiB, v7x: 64 MiB)."""
    try:
        cap = pltpu.get_tpu_info().vmem_capacity_bytes
    except Exception:
        cap = 128 * 1024 * 1024
    return min(int(cap) * 3 // 4, 96 * 1024 * 1024)


def fc_block_kernel(x_ref, wt_ref, scale_ref, shift_ref, o_ref):
    # Linear (bias=False) on the MXU: bf16 inputs, f32 accumulation.
    y = jnp.dot(x_ref[...], wt_ref[...], preferred_element_type=jnp.float32)
    # ReLU (VPU, f32).
    y = jnp.maximum(y, 0.0)
    # Dropout: identity in eval mode.
    # TODO(synk): training-mode dropout would need pltpu.prng_seed/prng_random_bits.
    # BatchNorm1d folded into a per-feature affine (f32), applied once per tile.
    o_ref[...] = (y * scale_ref[...] + shift_ref[...]).astype(o_ref.dtype)


def prepare_fc_block_params(weight, gamma, beta, running_mean, running_var,
                            eps=1e-5, compute_dtype=jnp.bfloat16):
    """One-time parameter prep (call at load time, not per forward):
    fold eval-mode BatchNorm1d into (scale, shift), transpose the Linear
    weight to [Cin, Cout], zero-pad both feature axes to multiples of 128 and
    cast the weight to the MXU compute dtype."""
    cout, cin = weight.shape
    scale = (gamma / jnp.sqrt(running_var + eps)).astype(jnp.float32)   # [Cout]
    shift = (beta - running_mean * scale).astype(jnp.float32)           # [Cout]

    cin_p = _round_up(cin, 128)
    cout_p = _round_up(cout, 128)

    wt = jnp.zeros((cin_p, cout_p), compute_dtype)
    wt = wt.at[:cin, :cout].set(weight.T.astype(compute_dtype))
    scale2d = jnp.zeros((1, cout_p), jnp.float32).at[0, :cout].set(scale)
    shift2d = jnp.zeros((1, cout_p), jnp.float32).at[0, :cout].set(shift)
    return wt, scale2d, shift2d, (cin, cout)


def fc_block_apply(x, wt, scale2d, shift2d, dims, *, out_dtype=None,
                   tm_max=512, tn_max=1024, vmem_limit_bytes=None,
                   return_padded=False):
    """Fused FCBlock forward (eval mode). x: [B, Cin], any float dtype.
    Fast path: pass out_dtype=jnp.bfloat16 (and return_padded=True when the
    consumer can use the 128-padded feature layout)."""
    cin, cout = dims
    b = x.shape[0]
    cin_p, cout_p = wt.shape
    compute_dtype = wt.dtype
    out_dtype = x.dtype if out_dtype is None else out_dtype

    if vmem_limit_bytes is None:
        vmem_limit_bytes = _default_vmem_limit()

    cdt_bytes = jnp.dtype(compute_dtype).itemsize
    out_bytes = jnp.dtype(out_dtype).itemsize

    # ---- tile selection ----
    # tn: largest lane-dense (multiple-of-128) divisor of Cout_p, capped.
    tn = _largest_tile(cout_p, tn_max)
    # tm: sublane-aligned for bf16 x tiles (16), capped; no M padding of the
    # array itself -- Pallas handles the ragged last M block.
    tm = _round_up(min(tm_max, _round_up(b, 16)), 16)

    # Give v7x's two TensorCores something to split when the whole problem
    # would otherwise be a single grid step.
    if pl.cdiv(b, tm) == 1 and cout_p // tn == 1 and cout_p >= 256:
        tn = _largest_tile(cout_p, cout_p // 2)

    # VMEM footprint guard: double-buffered x, Wt, out tiles + BN vectors must
    # fit the scoped limit (v7x has only 64 MiB physical VMEM).
    def footprint(tm_, tn_):
        return (2 * tm_ * cin_p * cdt_bytes        # x tiles (double-buffered)
                + 2 * cin_p * tn_ * cdt_bytes      # Wt tiles
                + 2 * tm_ * tn_ * out_bytes        # out tiles
                + 2 * 2 * tn_ * 4)                 # BN scale/shift tiles

    budget = vmem_limit_bytes - (2 << 20)          # small headroom
    while footprint(tm, tn) > budget and tn > 128:
        tn = _largest_tile(cout_p, tn - 128)
    while footprint(tm, tn) > budget and tm > 16:
        tm = _round_up(max(16, tm // 2), 16)
    # TODO(synk): for very large Cin the right fix is a K grid axis ("arbitrary")
    # with an f32 VMEM accumulator and a pl.when-gated ReLU+BN epilogue.

    m_tiles = pl.cdiv(b, tm)       # partial last M block: stores are masked
    n_tiles = cout_p // tn
    # M is the innermost (fastest) grid axis -> the weight block index is
    # unchanged across consecutive steps, so Pallas keeps it resident.
    grid = (n_tiles, m_tiles)

    # Single fused cast (+ K-only zero pad) of the activations.
    x_c = x if x.dtype == compute_dtype else x.astype(compute_dtype)
    if cin_p != cin:
        x_c = jnp.pad(x_c, ((0, 0), (0, cin_p - cin)))

    cost = pl.CostEstimate(
        flops=2 * b * cin_p * cout_p,
        transcendentals=0,
        bytes_accessed=(b * cin_p * cdt_bytes          # x
                        + cin_p * cout_p * cdt_bytes   # Wt
                        + 2 * cout_p * 4               # BN scale/shift
                        + b * cout_p * out_bytes),     # out
    )

    out_p = pl.pallas_call(
        fc_block_kernel,
        out_shape=jax.ShapeDtypeStruct((b, cout_p), out_dtype),
        grid=grid,
        in_specs=[
            pl.BlockSpec((tm, cin_p), lambda j, i: (i, 0)),   # x tile (K whole)
            pl.BlockSpec((cin_p, tn), lambda j, i: (0, j)),   # Wt tile
            pl.BlockSpec((1, tn), lambda j, i: (0, j)),       # BN scale
            pl.BlockSpec((1, tn), lambda j, i: (0, j)),       # BN shift
        ],
        out_specs=pl.BlockSpec((tm, tn), lambda j, i: (i, j)),
        compiler_params=pltpu.CompilerParams(
            dimension_semantics=("parallel", "parallel"),
            vmem_limit_bytes=vmem_limit_bytes,
        ),
        cost_estimate=cost,
    )(x_c, wt, scale2d, shift2d)

    if return_padded or cout_p == cout:
        return out_p
    # NOTE: padded feature columns hold the broadcast BN shift, not zeros.
    return out_p[:, :cout]


if __name__ == "__main__":
    key = jax.random.PRNGKey(0)
    k_x, k_w, k_g, k_b, k_m, k_v = jax.random.split(key, 6)

    B, Cin, Cout = 8, 32, 64

    x = jax.random.normal(k_x, (B, Cin), dtype=jnp.float32)
    # nn.Linear(Cin, Cout, bias=False) weight: [Cout, Cin]
    weight = jax.random.normal(k_w, (Cout, Cin), dtype=jnp.float32) * (1.0 / jnp.sqrt(Cin))
    # BatchNorm1d(Cout) parameters / running stats.
    gamma = 1.0 + 0.1 * jax.random.normal(k_g, (Cout,), dtype=jnp.float32)
    beta = 0.1 * jax.random.normal(k_b, (Cout,), dtype=jnp.float32)
    running_mean = 0.05 * jax.random.normal(k_m, (Cout,), dtype=jnp.float32)
    running_var = jnp.abs(jax.random.normal(k_v, (Cout,), dtype=jnp.float32)) + 0.5

    # One-time parameter preparation (BN fold + weight transpose/pad/cast).
    wt, scale2d, shift2d, dims = prepare_fc_block_params(
        weight, gamma, beta, running_mean, running_var)

    out = fc_block_apply(x, wt, scale2d, shift2d, dims)
    out = jax.block_until_ready(out)

    # Pure-JAX eval-mode reference (f32).
    eps = 1e-5
    ref = jnp.maximum(x @ weight.T, 0.0)
    ref = (ref - running_mean) / jnp.sqrt(running_var + eps) * gamma + beta

    assert out.shape == (B, Cout)
    # bf16 MXU inputs with f32 accumulation -> slightly looser tolerance.
    assert jnp.allclose(out, ref, atol=5e-2, rtol=5e-2), "mismatch vs reference"

    print("KERNEL_OK")
</pallas_src>

<mosaic_0001>
module attributes {stable_mosaic.version = 11 : i64} {
  func.func @fc_block_kernel(%arg0: i32, %arg1: i32, %arg2: memref<16x128xbf16, #tpu.memory_space<vmem>>, %arg3: memref<128x128xbf16, #tpu.memory_space<vmem>>, %arg4: memref<1x128xf32, #tpu.memory_space<vmem>>, %arg5: memref<1x128xf32, #tpu.memory_space<vmem>>, %arg6: memref<16x128xf32, #tpu.memory_space<vmem>>) attributes {dimension_semantics = [#tpu.dimension_semantics<parallel>, #tpu.dimension_semantics<parallel>], iteration_bounds = array<i64: 1, 1>, scalar_prefetch = 0 : i64, scratch_operands = 0 : i64, tpu.core_type = #tpu.core_type<tc>, window_params = [{transform_indices = @transform_0, window_bounds = array<i64: 16, 128>}, {transform_indices = @transform_1, window_bounds = array<i64: 128, 128>}, {transform_indices = @transform_2, window_bounds = array<i64: 1, 128>}, {transform_indices = @transform_3, window_bounds = array<i64: 1, 128>}, {transform_indices = @transform_4, window_bounds = array<i64: 16, 128>}]} {
    %c0 = arith.constant 0 : index
    %c0_0 = arith.constant 0 : index
    %0 = vector.load %arg2[%c0, %c0_0] : memref<16x128xbf16, #tpu.memory_space<vmem>>, vector<16x128xbf16>
    %c0_1 = arith.constant 0 : index
    %c0_2 = arith.constant 0 : index
    %1 = vector.load %arg3[%c0_1, %c0_2] : memref<128x128xbf16, #tpu.memory_space<vmem>>, vector<128x128xbf16>
    %cst = arith.constant dense<0.000000e+00> : vector<16x128xf32>
    %2 = tpu.matmul %0, %1, %cst {dimension_numbers = #tpu.dot_dimension_numbers<[1], [0], [0], [1], [0, 0, 1, 1], [], []>} : vector<16x128xbf16>, vector<128x128xbf16>, vector<16x128xf32> -> vector<16x128xf32>
    %cst_3 = arith.constant 0.000000e+00 : f32
    %3 = vector.broadcast %cst_3 : f32 to vector<16x128xf32>
    %4 = arith.maximumf %2, %3 : vector<16x128xf32>
    %c0_4 = arith.constant 0 : index
    %c0_5 = arith.constant 0 : index
    %5 = vector.load %arg4[%c0_4, %c0_5] : memref<1x128xf32, #tpu.memory_space<vmem>>, vector<1x128xf32>
    %6 = vector.broadcast %5 : vector<1x128xf32> to vector<16x128xf32>
    %7 = arith.mulf %4, %6 : vector<16x128xf32>
    %c0_6 = arith.constant 0 : index
    %c0_7 = arith.constant 0 : index
    %8 = vector.load %arg5[%c0_6, %c0_7] : memref<1x128xf32, #tpu.memory_space<vmem>>, vector<1x128xf32>
    %9 = vector.broadcast %8 : vector<1x128xf32> to vector<16x128xf32>
    %10 = arith.addf %7, %9 : vector<16x128xf32>
    %c0_8 = arith.constant 0 : index
    %c0_9 = arith.constant 0 : index
    %11 = vector.load %arg6[%c0_8, %c0_9] : memref<16x128xf32, #tpu.memory_space<vmem>>, vector<16x128xf32>
    tpu.vector_store %arg6[%c0_8, %c0_9], %10 {strides = array<i32>} : memref<16x128xf32, #tpu.memory_space<vmem>>, vector<16x128xf32>,
    return
  }
  func.func @transform_0(%arg0: i32, %arg1: i32) -> (i32, i32) {
    %c0_i32 = arith.constant 0 : i32
    %c0_i32_0 = arith.constant 0 : i32
    return %arg1, %c0_i32 : i32, i32
  }
  func.func @transform_1(%arg0: i32, %arg1: i32) -> (i32, i32) {
    %c0_i32 = arith.constant 0 : i32
    %c0_i32_0 = arith.constant 0 : i32
    return %c0_i32, %arg0 : i32, i32
  }
  func.func @transform_2(%arg0: i32, %arg1: i32) -> (i32, i32) {
    %c0_i32 = arith.constant 0 : i32
    %c0_i32_0 = arith.constant 0 : i32
    return %c0_i32, %arg0 : i32, i32
  }
  func.func @transform_3(%arg0: i32, %arg1: i32) -> (i32, i32) {
    %c0_i32 = arith.constant 0 : i32
    %c0_i32_0 = arith.constant 0 : i32
    return %c0_i32, %arg0 : i32, i32
  }
  func.func @transform_4(%arg0: i32, %arg1: i32) -> (i32, i32) {
    %c0_i32 = arith.constant 0 : i32
    return %arg1, %arg0 : i32, i32
  }
}

</mosaic_0001>

<llo_original>
// kernel: tpu_custom_call.1
$region0: #{tpu_custom_call.1}
  #allocation0 [shape = 'u32[]', space=smem, size = 0x4, offset = 0x4, fixed_abs, tag = 'smem constant byte address 0x4 - core index']
  #allocation1 [shape = 'u32[144,128]{1,0:T(1,128)}', space=vmem, size = 0x12000, scoped, tag = 'internal scratch']
  %s0 = inlined_call_operand.hbm [shape: bf16[8,128], index: 0, kind: input, shape index: {}]
  %s1 = inlined_call_operand.hbm [shape: bf16[128,128], index: 1, kind: input, shape index: {}]
  %s2 = inlined_call_operand.hbm [shape: f32[1,128], index: 2, kind: input, shape index: {}]
  %s3 = inlined_call_operand.hbm [shape: f32[1,128], index: 3, kind: input, shape index: {}]
  %s4 = inlined_call_operand.hbm [shape: f32[8,128], index: 4, kind: output, shape index: {}]
  %s5 = sld [smem:[#allocation0]]
  $region42: #{tpu_custom_call.1} parent=0
    _
  %s7 = ssub.s32 1, %s5
  %s8 = scalar_select 0, %s7, %s5
  $region1: #{tpu_custom_call.1} parent=0
    #allocation2 [shape = 'u8[4096]{0}', space=vmem, size = 0x1000, scoped, tag = 'input window, operand 0, single buffered']
    #allocation3 [shape = 's32[1]{0}', space=sflag, size = 0x4, scoped, tag = 'scoped memory for tpu_custom_call.1']
    #allocation4 [shape = 's32[1]{0}', space=sflag, size = 0x4, scoped, tag = 'scoped memory for tpu_custom_call.1']
    #allocation5 [shape = 'u8[32768]{0}', space=vmem, size = 0x8000, scoped, tag = 'input window, operand 1, single buffered']
    #allocation6 [shape = 's32[1]{0}', space=sflag, size = 0x4, scoped, tag = 'scoped memory for tpu_custom_call.1']
    #allocation7 [shape = 'u8[512]{0}', space=vmem, size = 0x400, scoped, tag = 'input window, operand 2, single buffered']
    #allocation8 [shape = 'u8[512]{0}', space=vmem, size = 0x400, scoped, tag = 'input window, operand 3, single buffered']
    #allocation9 [shape = 's32[1]{0}', space=sflag, size = 0x4, scoped, tag = 'scoped memory for tpu_custom_call.1']
    #allocation10 [shape = 'u8[8192]{0}', space=vmem, size = 0x2000, scoped, tag = 'output window, operand 0, single buffered']
    %9 = vsyncpa [#allocation3], 0
    %10 = vsyncpa [#allocation6], 0
    %11 = vsyncpa [#allocation9], 0
    %12 = vsyncpa [#allocation4], 0
    // Predicated region
    $region2: #{tpu_custom_call.1} parent=1 // pred_check
      _
    $region3: #{tpu_custom_call.1} parent=1 // pred_check_branch
      %14 = sbr.rel (0) target = $region5
    $region4: #{tpu_custom_call.1} parent=1 // pred_region
      %s16 = ssub.s32 128, 64
      %17 = vsyncadd [#allocation3], %s16
      %s18 = sshll.u32 [#allocation2], 4
      %s19 = int_to_ptr.vmem [resolvable:$true] %s18
      %24 = dma.hbm_to_vmem [thread:$0]  %s0, 64, %s19, [#allocation3], 64, 64, 4
    $region5: #{tpu_custom_call.1} parent=1 // pred_fallthru
      _
    // Predicated region
    $region6: #{tpu_custom_call.1} parent=1 // pred_check
      _
    $region7: #{tpu_custom_call.1} parent=1 // pred_check_branch
      %26 = sbr.rel (0) target = $region9
    $region8: #{tpu_custom_call.1} parent=1 // pred_region
      %s28 = ssub.s32 1024, 1024
      %29 = vsyncadd [#allocation6], %s28
      %s30 = sshll.u32 [#allocation5], 4
      %s31 = int_to_ptr.vmem [resolvable:$true] %s30
      %36 = dma.hbm_to_vmem [thread:$0]  %s1, 1024, %s31, [#allocation6], 64, 64, 4
    $region9: #{tpu_custom_call.1} parent=1 // pred_fallthru
      _
    // Predicated region
    $region10: #{tpu_custom_call.1} parent=1 // pred_check
      _
    $region11: #{tpu_custom_call.1} parent=1 // pred_check_branch
      %38 = sbr.rel (0) target = $region13
    $region12: #{tpu_custom_call.1} parent=1 // pred_region
      %s40 = ssub.s32 16, 16
      %41 = vsyncadd [#allocation6], %s40
      %s43 = sshll.u32 [#allocation7], 4
      %s44 = int_to_ptr.vmem [resolvable:$true] %s43
      %46 = dma.hbm_to_vmem [thread:$0]  %s2, 16, %s44, [#allocation6]
    $region13: #{tpu_custom_call.1} parent=1 // pred_fallthru
      _
    // Predicated region
    $region14: #{tpu_custom_call.1} parent=1 // pred_check
      _
    $region15: #{tpu_custom_call.1} parent=1 // pred_check_branch
      %48 = sbr.rel (0) target = $region17
    $region16: #{tpu_custom_call.1} parent=1 // pred_region
      %s50 = ssub.s32 16, 16
      %51 = vsyncadd [#allocation9], %s50
      %s53 = sshll.u32 [#allocation8], 4
      %s54 = int_to_ptr.vmem [resolvable:$true] %s53
      %56 = dma.hbm_to_vmem [thread:$0]  %s3, 16, %s54, [#allocation9]
    $region17: #{tpu_custom_call.1} parent=1 // pred_fallthru
      _
    // Predicated region
    $region18: #{tpu_custom_call.1} parent=1 // pred_check
      _
    $region19: #{tpu_custom_call.1} parent=1 // pred_check_branch
      %58 = sbr.rel (0) target = $region21
    $region20: #{tpu_custom_call.1} parent=1 // pred_region
      %59 = dma.done [#allocation3], 128
    $region21: #{tpu_custom_call.1} parent=1 // pred_fallthru
      _
    // Predicated region
    $region22: #{tpu_custom_call.1} parent=1 // pred_check
      _
    $region23: #{tpu_custom_call.1} parent=1 // pred_check_branch
      %61 = sbr.rel (0) target = $region25
    $region24: #{tpu_custom_call.1} parent=1 // pred_region
      %62 = dma.done [#allocation6], 1024
    $region25: #{tpu_custom_call.1} parent=1 // pred_fallthru
      _
    // Predicated region
    $region26: #{tpu_custom_call.1} parent=1 // pred_check
      _
    $region27: #{tpu_custom_call.1} parent=1 // pred_check_branch
      %64 = sbr.rel (0) target = $region29
    $region28: #{tpu_custom_call.1} parent=1 // pred_region
      %65 = dma.done [#allocation6], 16
    $region29: #{tpu_custom_call.1} parent=1 // pred_fallthru
      _
    // Predicated region
    $region30: #{tpu_custom_call.1} parent=1 // pred_check
      _
    $region31: #{tpu_custom_call.1} parent=1 // pred_check_branch
      %67 = sbr.rel (0) target = $region33
    $region32: #{tpu_custom_call.1} parent=1 // pred_region
      %68 = dma.done [#allocation9], 16
    $region33: #{tpu_custom_call.1} parent=1 // pred_fallthru
      _
    %v70 = vld [vmem:[#allocation2] sm:$0xf]
    %v71 = vld [vmem:[#allocation2 + $0x4] sm:$0xf]
    %v72 = vld [vmem:[#allocation5] sm:$0xf]
    %v73 = vld [vmem:[#allocation5 + $0x4] sm:$0xf]
    %v74 = vld [vmem:[#allocation5 + $0x8] sm:$0xf]
    %v75 = vld [vmem:[#allocation5 + $0xc] sm:$0xf]
    %v76 = vld [vmem:[#allocation5 + $0x10] sm:$0xf]
    %v77 = vld [vmem:[#allocation5 + $0x14] sm:$0xf]
    %v78 = vld [vmem:[#allocation5 + $0x18] sm:$0xf]
    %v79 = vld [vmem:[#allocation5 + $0x1c] sm:$0xf]
    %v80 = vld [vmem:[#allocation5 + $0x20] sm:$0xf]
    %v81 = vld [vmem:[#allocation5 + $0x24] sm:$0xf]
    %v82 = vld [vmem:[#allocation5 + $0x28] sm:$0xf]
    %v83 = vld [vmem:[#allocation5 + $0x2c] sm:$0xf]
    %v84 = vld [vmem:[#allocation5 + $0x30] sm:$0xf]
    %v85 = vld [vmem:[#allocation5 + $0x34] sm:$0xf]
    %v86 = vld [vmem:[#allocation5 + $0x38] sm:$0xf]
    %v87 = vld [vmem:[#allocation5 + $0x3c] sm:$0xf]
    %v90 = vunpack.c.l.b16 %v70
    %v91 = vunpack.c.l.b16 %v71
    %v92 = vpack.c.b16 %v91, %v90
    %v110 = vunpack.c.l.b16 %v72
    %v111 = vunpack.c.l.b16 %v73
    %v112 = vunpack.c.l.b16 %v74
    %v113 = vunpack.c.l.b16 %v75
    %v114 = vunpack.c.l.b16 %v76
    %v115 = vunpack.c.l.b16 %v77
    %v116 = vunpack.c.l.b16 %v78
    %v117 = vunpack.c.l.b16 %v79
    %v118 = vunpack.c.l.b16 %v80
    %v119 = vunpack.c.l.b16 %v81
    %v120 = vunpack.c.l.b16 %v82
    %v121 = vunpack.c.l.b16 %v83
    %v122 = vunpack.c.l.b16 %v84
    %v123 = vunpack.c.l.b16 %v85
    %v124 = vunpack.c.l.b16 %v86
    %v125 = vunpack.c.l.b16 %v87
    %v126 = vpack.c.b16 %v111, %v110
    %v127 = vpack.c.b16 %v113, %v112
    %v128 = vpack.c.b16 %v115, %v114
    %v129 = vpack.c.b16 %v117, %v116
    %v130 = vpack.c.b16 %v119, %v118
    %v131 = vpack.c.b16 %v121, %v120
    %v132 = vpack.c.b16 %v123, %v122
    %v133 = vpack.c.b16 %v125, %v124
    %142 = vmatprep.subr.bf16.mxu0 0
    %143 = vmatpush1.bf16.msra.mxu0 %v126
    %144 = vmatprep.subr.bf16.mxu0 0
    %145 = vmatpush1.bf16.msra.mxu0 %v127
    %146 = vmatprep.subr.bf16.mxu0 0
    %147 = vmatpush1.bf16.msra.mxu0 %v128
    %148 = vmatprep.subr.bf16.mxu0 0
    %149 = vmatpush1.bf16.msra.mxu0 %v129
    %150 = vmatprep.subr.bf16.mxu0 0
    %151 = vmatpush1.bf16.msra.mxu0 %v130
    %152 = vmatprep.subr.bf16.mxu0 0
    %153 = vmatpush1.bf16.msra.mxu0 %v131
    %154 = vmatprep.subr.bf16.mxu0 0
    %155 = vmatpush1.bf16.msra.mxu0 %v132
    %156 = vmatprep.subr.bf16.mxu0 0
    %157 = vmatpush1.bf16.msra.mxu0 %v133
    %158 = vmatprep.subr.bf16.mxu0 0
    %159 = vmatpush1.bf16.msra.mxu0 0
    %160 = vmatprep.subr.bf16.mxu0 0
    %161 = vmatpush1.bf16.msra.mxu0 0
    %162 = vmatprep.subr.bf16.mxu0 0
    %163 = vmatpush1.bf16.msra.mxu0 0
    %164 = vmatprep.subr.bf16.mxu0 0
    %165 = vmatpush1.bf16.msra.mxu0 0
    %166 = vmatprep.subr.bf16.mxu0 0
    %167 = vmatpush1.bf16.msra.mxu0 0
    %168 = vmatprep.subr.bf16.mxu0 0
    %169 = vmatpush1.bf16.msra.mxu0 0
    %170 = vmatprep.subr.bf16.mxu0 0
    %171 = vmatpush1.bf16.msra.mxu0 0
    %172 = vmatprep.subr.bf16.mxu0 0
    %173 = vmatpush1.bf16.msra.mxu0 0
    %174 = vmatprep.mubr.bf16.mxu0 0
    %175 = vmatmul.mubr.bf16.gmra.mrb[0].mxu0 %v92
    %v176 = vpop.f32.mrb[0].mxu0
    %v177 = vadd.f32 0.0, %v176
    %v178 = vpop.f32.mrb[0].mxu0
    %v179 = vpop.f32.mrb[0].mxu0
    %v180 = vadd.f32 0.0, %v179
    %v181 = vpop.f32.mrb[0].mxu0
    %182 = vdwg.mxu0
    %v183 = vmax.f32 %v177, 0.0
    %v184 = vmax.f32 %v180, 0.0
    %v185 = vld [vmem:[#allocation7] sm:$0x1]
    %v187 = vlaneseq
    %v188 = vshrl.u32 %v187, 7
    %v189 = vsub.s32 0, %v188
    %v190 = vrot.slane %v185, %v189
    %v192 = vmul.f32 %v183, %v190
    %v193 = vmul.f32 %v184, %v190
    %v194 = vld [vmem:[#allocation8] sm:$0x1]
    %v196 = vlaneseq
    %v197 = vshrl.u32 %v196, 7
    %v198 = vsub.s32 0, %v197
    %v199 = vrot.slane %v194, %v198
    %v201 = vadd.f32 %v192, %v199
    %v202 = vadd.f32 %v193, %v199
    %203 = vst [vmem:[#allocation10] sm:$0xff] %v201
    %204 = vst [vmem:[#allocation10 + $0x8] sm:$0xff] %v202
    // Predicated region
    $region34: #{tpu_custom_call.1} parent=1 // pred_check
      _
    $region35: #{tpu_custom_call.1} parent=1 // pred_check_branch
      %206 = sbr.rel (0) target = $region37
    $region36: #{tpu_custom_call.1} parent=1 // pred_region
      %s208 = ssub.s32 256, 128
      %209 = vsyncadd [#allocation4], %s208
      %s210 = sshll.u32 [#allocation10], 4
      %s211 = int_to_ptr.vmem [resolvable:$true] %s210
      %216 = dma.vmem_to_hbm [thread:$0]  %s211, 128, %s4, [#allocation4], 128, 128, 8
    $region37: #{tpu_custom_call.1} parent=1 // pred_fallthru
      _
    // Predicated region
    $region38: #{tpu_custom_call.1} parent=1 // pred_check
      _
    $region39: #{tpu_custom_call.1} parent=1 // pred_check_branch
      %218 = sbr.rel (0) target = $region41
    $region40: #{tpu_custom_call.1} parent=1 // pred_region
      %219 = dma.done [#allocation4], 256
    $region41: #{tpu_custom_call.1} parent=1 // pred_fallthru
      _
    %220 = vsyncpa [#allocation3], 1
    %221 = vsyncpa [#allocation6], 1
    %222 = vsyncpa [#allocation9], 1
    %223 = vsyncpa [#allocation4], 1

</llo_original>
